<compile_context>
chip_gen: v5e
topology: v5e:2x2
jax: 0.10.0
libtpu: 0.0.40
codegen_flags: <defaults>
</compile_context>

<pallas_src>
import jax
import jax.numpy as jnp
import numpy as np
from jax.experimental import pallas as pl
from jax.experimental.pallas import tpu as pltpu


def _decoder_kernel(z_ref, w1_ref, b1_ref, wc1_ref, bc1_ref,
                    wc2_ref, bc2_ref, wm2_ref, bm2_ref, y_ref):
    """One batch tile of the full decoder forward: 4 fused MXU matmuls."""
    z = z_ref[...]                                                  # (Bt, latent)

    # mlp1 + ReLU -> wide h0, lanes ordered position-major / channel-minor.
    h0 = jnp.dot(z, w1_ref[...], preferred_element_type=jnp.float32) + b1_ref[...]
    h0 = jnp.maximum(h0, 0.0)                                       # (Bt, Lq*H)

    # ConvTranspose1d(k=2, s=2) + ReLU as ONE matmul:
    #   cols [0, Lq*H)      -> even output positions (2t)   via W[:, :, 0]
    #   cols [Lq*H, 2*Lq*H) -> odd  output positions (2t+1) via W[:, :, 1]
    g = jnp.dot(h0, wc1_ref[...], preferred_element_type=jnp.float32) + bc1_ref[...]
    g = jnp.maximum(g, 0.0)                                         # (Bt, 2*Lq*H)

    # ConvTranspose1d(k=3, s=2) + ReLU as ONE matmul producing all four output
    # phases (j = 4s+0..3) plus the tail position j = 4*Lq.  The one-position
    # shift of the overlapping tap is encoded in wc2's block structure, so no
    # in-kernel roll / concat-with-zeros is needed.
    r = jnp.dot(g, wc2_ref[...], preferred_element_type=jnp.float32) + bc2_ref[...]
    r = jnp.maximum(r, 0.0)                                         # (Bt, (4*Lq+1)*H)

    # mlp2 applied per position via a block-diagonal weight -> lane-dense store.
    y_ref[...] = (jnp.dot(r, wm2_ref[...], preferred_element_type=jnp.float32)
                  + bm2_ref[...])                                   # (Bt, (4*Lq+1)*Cin)


def signal_cnn_decoder(z, kparams, *, sequence_length, block_b):
    """z: (B, latent) f32.  Returns (B, 4*(sequence_length//4)+1, input_size)."""
    B, latent = z.shape
    Lq = sequence_length // 4
    L2 = 4 * Lq + 1
    H = kparams["bc1"].shape[-1] // (2 * Lq)
    Cin = kparams["bm2"].shape[-1] // L2
    assert B % block_b == 0, "batch must be divisible by the batch tile"

    args = (z, kparams["w1"], kparams["b1"], kparams["wc1"], kparams["bc1"],
            kparams["wc2"], kparams["bc2"], kparams["wm2"], kparams["bm2"])

    in_specs = [pl.BlockSpec((block_b, latent), lambda i: (i, 0))]
    for a in args[1:]:
        # Weights / biases: full-array blocks, resident across the batch grid.
        in_specs.append(pl.BlockSpec(a.shape, lambda i: (0, 0)))
    out_specs = pl.BlockSpec((block_b, L2 * Cin), lambda i: (i, 0))

    flops = 2 * B * (latent * (Lq * H)
                     + (Lq * H) * (2 * Lq * H)
                     + (2 * Lq * H) * (L2 * H)
                     + (L2 * H) * (L2 * Cin))
    bytes_accessed = 4 * (z.size + B * L2 * Cin
                          + sum(int(np.prod(a.shape)) for a in args[1:]))

    y_wide = pl.pallas_call(
        _decoder_kernel,
        out_shape=jax.ShapeDtypeStruct((B, L2 * Cin), jnp.float32),
        grid=(B // block_b,),
        in_specs=in_specs,
        out_specs=out_specs,
        compiler_params=pltpu.CompilerParams(
            dimension_semantics=("parallel",),
            vmem_limit_bytes=32 * 1024 * 1024),
        cost_estimate=pl.CostEstimate(flops=int(flops), transcendentals=0,
                                      bytes_accessed=int(bytes_accessed)),
    )(*args)

    # Pure layout plumbing (no arithmetic): interleave the four phase streams
    # and append the tail position -> (B, 4*Lq+1, Cin), matching PyTorch.
    main = y_wide[:, :4 * Lq * Cin].reshape(B, 4, Lq, Cin)
    main = jnp.transpose(main, (0, 2, 1, 3)).reshape(B, 4 * Lq, Cin)
    tail = y_wide[:, 4 * Lq * Cin:].reshape(B, 1, Cin)
    return jnp.concatenate([main, tail], axis=1)


def prepare_params(raw, sequence_length):
    """Build the block-structured, kernel-ready weights (wrapper-side, one-time)."""
    Lq = sequence_length // 4
    H = raw["wc1"].shape[0]
    latent = raw["wm1"].shape[1]
    Cin = raw["wm2"].shape[0]
    L2 = 4 * Lq + 1
    f32 = jnp.float32
    eye = jnp.eye(Lq, dtype=f32)
    sup = jnp.eye(Lq, k=1, dtype=f32)          # block superdiagonal (the tap shift)

    def bd(m):                                  # block-diagonal with Lq blocks
        return jnp.kron(eye, m)

    # mlp1: reorder output features from PyTorch's flat (c*Lq + t) layout into
    # the kernel's wide position-major (t*H + c) layout.
    w1 = raw["wm1"].reshape(H, Lq, latent).transpose(1, 0, 2).reshape(Lq * H, latent).T
    b1 = raw["bm1"].reshape(H, Lq).T.reshape(1, Lq * H)

    # conv1 (k=2, s=2): [even | odd] streams in one matmul.
    a0, a1 = raw["wc1"][:, :, 0], raw["wc1"][:, :, 1]        # (H_in, H_out)
    wc1 = jnp.concatenate([bd(a0), bd(a1)], axis=1)           # (Lq*H, 2*Lq*H)
    bc1 = jnp.tile(raw["bc1"], 2 * Lq).reshape(1, 2 * Lq * H)

    # conv2 (k=3, s=2): phases j=4s, 4s+1, 4s+2, 4s+3 plus tail j=4*Lq.
    b0, b1k, b2 = (raw["wc2"][:, :, k] for k in range(3))
    zww = jnp.zeros((Lq * H, Lq * H), f32)
    zwh = jnp.zeros((Lq * H, H), f32)
    tail_col = jnp.concatenate([jnp.zeros(((Lq - 1) * H, H), f32), b2], axis=0)
    e_rows = jnp.concatenate([bd(b0), bd(b1k), bd(b2), zww, zwh], axis=1)
    o_rows = jnp.concatenate([jnp.kron(sup, b2), zww, bd(b0), bd(b1k), tail_col], axis=1)
    wc2 = jnp.concatenate([e_rows, o_rows], axis=0)           # (2*Lq*H, L2*H)
    bc2 = jnp.tile(raw["bc2"], L2).reshape(1, L2 * H)

    # mlp2 per position: block-diagonal of W.T over all L2 positions.
    wm2 = jnp.kron(jnp.eye(L2, dtype=f32), raw["wm2"].T)      # (L2*H, L2*Cin)
    bm2 = jnp.tile(raw["bm2"], L2).reshape(1, L2 * Cin)

    return {"w1": w1, "b1": b1, "wc1": wc1, "bc1": bc1,
            "wc2": wc2, "bc2": bc2, "wm2": wm2, "bm2": bm2}


def init_raw_params(key, sequence_length, latent_size, hidden_size, input_size):
    """PyTorch-layout parameters with deterministic uniform init."""
    Lq = sequence_length // 4
    H = hidden_size
    ks = jax.random.split(key, 8)

    def u(k, shape, fan_in):
        bound = 1.0 / float(np.sqrt(fan_in))
        return jax.random.uniform(k, shape, jnp.float32, -bound, bound)

    return {
        "wm1": u(ks[0], (H * Lq, latent_size), latent_size),   # Linear (out, in)
        "bm1": u(ks[1], (H * Lq,), latent_size),
        "wc1": u(ks[2], (H, H, 2), H * 2),                     # ConvTranspose1d (in, out, k)
        "bc1": u(ks[3], (H,), H * 2),
        "wc2": u(ks[4], (H, H, 3), H * 3),
        "bc2": u(ks[5], (H,), H * 3),
        "wm2": u(ks[6], (input_size, H), H),                   # Linear (out, in)
        "bm2": u(ks[7], (input_size,), H),
    }


def _conv_transpose1d_ref(x, w, b, stride):
    # PyTorch ConvTranspose1d semantics, no padding.  x:(B,Ci,L)  w:(Ci,Co,K)
    B_, _, L = x.shape
    Co, K = w.shape[1], w.shape[2]
    out = jnp.zeros((B_, Co, (L - 1) * stride + K), jnp.float32)
    for i in range(L):
        for k in range(K):
            out = out.at[:, :, i * stride + k].add(
                jnp.einsum("bi,io->bo", x[:, :, i], w[:, :, k]))
    return out + b[None, :, None]


def reference_forward(z, raw, sequence_length):
    """Pure-JAX reference matching the PyTorch forward (for verification)."""
    Lq = sequence_length // 4
    B_ = z.shape[0]
    h = jax.nn.relu(z @ raw["wm1"].T + raw["bm1"])
    h = h.reshape(B_, -1, Lq)                                  # view -> (B, H, Lq)
    h = jax.nn.relu(_conv_transpose1d_ref(h, raw["wc1"], raw["bc1"], 2))
    h = jax.nn.relu(_conv_transpose1d_ref(h, raw["wc2"], raw["bc2"], 2))
    h = jnp.transpose(h, (0, 2, 1))                            # (B, L2, H)
    return h @ raw["wm2"].T + raw["bm2"]


if __name__ == "__main__":
    SEQ, LATENT, HIDDEN, CIN = 16, 16, 32, 8
    B, BLOCK_B = 16, 8                                         # 2-step "parallel" batch grid

    key = jax.random.PRNGKey(0)
    k_z, k_p = jax.random.split(key)
    z = jax.random.normal(k_z, (B, LATENT), dtype=jnp.float32)

    raw = init_raw_params(k_p, SEQ, LATENT, HIDDEN, CIN)
    kparams = prepare_params(raw, SEQ)

    y = signal_cnn_decoder(z, kparams, sequence_length=SEQ, block_b=BLOCK_B)
    y = jax.block_until_ready(y)                               # (B, 17, CIN)

    y_ref = reference_forward(z, raw, SEQ)
    np.testing.assert_allclose(np.asarray(y), np.asarray(y_ref), rtol=5e-3, atol=5e-3)

    print("KERNEL_OK")
</pallas_src>

<mosaic_0001>
module attributes {stable_mosaic.version = 11 : i64} {
  func.func @_decoder_kernel(%arg0: i32, %arg1: memref<8x16xf32, #tpu.memory_space<vmem>>, %arg2: memref<16x128xf32, #tpu.memory_space<vmem>>, %arg3: memref<1x128xf32, #tpu.memory_space<vmem>>, %arg4: memref<128x256xf32, #tpu.memory_space<vmem>>, %arg5: memref<1x256xf32, #tpu.memory_space<vmem>>, %arg6: memref<256x544xf32, #tpu.memory_space<vmem>>, %arg7: memref<1x544xf32, #tpu.memory_space<vmem>>, %arg8: memref<544x136xf32, #tpu.memory_space<vmem>>, %arg9: memref<1x136xf32, #tpu.memory_space<vmem>>, %arg10: memref<8x136xf32, #tpu.memory_space<vmem>>) attributes {dimension_semantics = [#tpu.dimension_semantics<parallel>], iteration_bounds = array<i64: 2>, scalar_prefetch = 0 : i64, scratch_operands = 0 : i64, tpu.core_type = #tpu.core_type<tc>, window_params = [{transform_indices = @transform_0, window_bounds = array<i64: 8, 16>}, {pipeline_mode = #tpu.pipeline_mode<synchronous>, transform_indices = @transform_1, window_bounds = array<i64: 16, 128>}, {pipeline_mode = #tpu.pipeline_mode<synchronous>, transform_indices = @transform_2, window_bounds = array<i64: 1, 128>}, {pipeline_mode = #tpu.pipeline_mode<synchronous>, transform_indices = @transform_3, window_bounds = array<i64: 128, 256>}, {pipeline_mode = #tpu.pipeline_mode<synchronous>, transform_indices = @transform_4, window_bounds = array<i64: 1, 256>}, {pipeline_mode = #tpu.pipeline_mode<synchronous>, transform_indices = @transform_5, window_bounds = array<i64: 256, 544>}, {pipeline_mode = #tpu.pipeline_mode<synchronous>, transform_indices = @transform_6, window_bounds = array<i64: 1, 544>}, {pipeline_mode = #tpu.pipeline_mode<synchronous>, transform_indices = @transform_7, window_bounds = array<i64: 544, 136>}, {pipeline_mode = #tpu.pipeline_mode<synchronous>, transform_indices = @transform_8, window_bounds = array<i64: 1, 136>}, {transform_indices = @transform_9, window_bounds = array<i64: 8, 136>}]} {
    %c0 = arith.constant 0 : index
    %c0_0 = arith.constant 0 : index
    %0 = vector.load %arg1[%c0, %c0_0] : memref<8x16xf32, #tpu.memory_space<vmem>>, vector<8x16xf32>
    %c0_1 = arith.constant 0 : index
    %c0_2 = arith.constant 0 : index
    %1 = vector.load %arg2[%c0_1, %c0_2] : memref<16x128xf32, #tpu.memory_space<vmem>>, vector<16x128xf32>
    %cst = arith.constant dense<0.000000e+00> : vector<8x128xf32>
    %2 = tpu.matmul %0, %1, %cst {dimension_numbers = #tpu.dot_dimension_numbers<[1], [0], [0], [1], [0, 0, 1, 1], [], []>} : vector<8x16xf32>, vector<16x128xf32>, vector<8x128xf32> -> vector<8x128xf32>
    %c0_3 = arith.constant 0 : index
    %c0_4 = arith.constant 0 : index
    %3 = vector.load %arg3[%c0_3, %c0_4] : memref<1x128xf32, #tpu.memory_space<vmem>>, vector<1x128xf32>
    %4 = vector.broadcast %3 : vector<1x128xf32> to vector<8x128xf32>
    %5 = arith.addf %2, %4 : vector<8x128xf32>
    %cst_5 = arith.constant 0.000000e+00 : f32
    %6 = vector.broadcast %cst_5 : f32 to vector<8x128xf32>
    %7 = arith.maximumf %5, %6 : vector<8x128xf32>
    %c0_6 = arith.constant 0 : index
    %c0_7 = arith.constant 0 : index
    %8 = vector.load %arg4[%c0_6, %c0_7] : memref<128x256xf32, #tpu.memory_space<vmem>>, vector<128x256xf32>
    %cst_8 = arith.constant dense<0.000000e+00> : vector<8x256xf32>
    %9 = tpu.matmul %7, %8, %cst_8 {dimension_numbers = #tpu.dot_dimension_numbers<[1], [0], [0], [1], [0, 0, 1, 1], [], []>} : vector<8x128xf32>, vector<128x256xf32>, vector<8x256xf32> -> vector<8x256xf32>
    %c0_9 = arith.constant 0 : index
    %c0_10 = arith.constant 0 : index
    %10 = vector.load %arg5[%c0_9, %c0_10] : memref<1x256xf32, #tpu.memory_space<vmem>>, vector<1x256xf32>
    %11 = vector.broadcast %10 : vector<1x256xf32> to vector<8x256xf32>
    %12 = arith.addf %9, %11 : vector<8x256xf32>
    %cst_11 = arith.constant 0.000000e+00 : f32
    %13 = vector.broadcast %cst_11 : f32 to vector<8x256xf32>
    %14 = arith.maximumf %12, %13 : vector<8x256xf32>
    %c0_12 = arith.constant 0 : index
    %c0_13 = arith.constant 0 : index
    %15 = vector.load %arg6[%c0_12, %c0_13] : memref<256x544xf32, #tpu.memory_space<vmem>>, vector<256x544xf32>
    %cst_14 = arith.constant dense<0.000000e+00> : vector<8x544xf32>
    %16 = tpu.matmul %14, %15, %cst_14 {dimension_numbers = #tpu.dot_dimension_numbers<[1], [0], [0], [1], [0, 0, 1, 1], [], []>} : vector<8x256xf32>, vector<256x544xf32>, vector<8x544xf32> -> vector<8x544xf32>
    %c0_15 = arith.constant 0 : index
    %c0_16 = arith.constant 0 : index
    %17 = vector.load %arg7[%c0_15, %c0_16] : memref<1x544xf32, #tpu.memory_space<vmem>>, vector<1x544xf32>
    %18 = vector.broadcast %17 : vector<1x544xf32> to vector<8x544xf32>
    %19 = arith.addf %16, %18 : vector<8x544xf32>
    %cst_17 = arith.constant 0.000000e+00 : f32
    %20 = vector.broadcast %cst_17 : f32 to vector<8x544xf32>
    %21 = arith.maximumf %19, %20 : vector<8x544xf32>
    %c0_18 = arith.constant 0 : index
    %c0_19 = arith.constant 0 : index
    %22 = vector.load %arg8[%c0_18, %c0_19] : memref<544x136xf32, #tpu.memory_space<vmem>>, vector<544x136xf32>
    %cst_20 = arith.constant dense<0.000000e+00> : vector<8x136xf32>
    %23 = tpu.matmul %21, %22, %cst_20 {dimension_numbers = #tpu.dot_dimension_numbers<[1], [0], [0], [1], [0, 0, 1, 1], [], []>} : vector<8x544xf32>, vector<544x136xf32>, vector<8x136xf32> -> vector<8x136xf32>
    %c0_21 = arith.constant 0 : index
    %c0_22 = arith.constant 0 : index
    %24 = vector.load %arg9[%c0_21, %c0_22] : memref<1x136xf32, #tpu.memory_space<vmem>>, vector<1x136xf32>
    %25 = vector.broadcast %24 : vector<1x136xf32> to vector<8x136xf32>
    %26 = arith.addf %23, %25 : vector<8x136xf32>
    %c0_23 = arith.constant 0 : index
    %c0_24 = arith.constant 0 : index
    %27 = vector.load %arg10[%c0_23, %c0_24] : memref<8x136xf32, #tpu.memory_space<vmem>>, vector<8x136xf32>
    tpu.vector_store %arg10[%c0_23, %c0_24], %26 {strides = array<i32>} : memref<8x136xf32, #tpu.memory_space<vmem>>, vector<8x136xf32>,
    return
  }
  func.func @transform_0(%arg0: i32) -> (i32, i32) {
    %c0_i32 = arith.constant 0 : i32
    %c0_i32_0 = arith.constant 0 : i32
    return %arg0, %c0_i32 : i32, i32
  }
  func.func @transform_1(%arg0: i32) -> (i32, i32) {
    %c0_i32 = arith.constant 0 : i32
    %c0_i32_0 = arith.constant 0 : i32
    %c0_i32_1 = arith.constant 0 : i32
    return %c0_i32, %c0_i32_0 : i32, i32
  }
  func.func @transform_2(%arg0: i32) -> (i32, i32) {
    %c0_i32 = arith.constant 0 : i32
    %c0_i32_0 = arith.constant 0 : i32
    %c0_i32_1 = arith.constant 0 : i32
    return %c0_i32, %c0_i32_0 : i32, i32
  }
  func.func @transform_3(%arg0: i32) -> (i32, i32) {
    %c0_i32 = arith.constant 0 : i32
    %c0_i32_0 = arith.constant 0 : i32
    %c0_i32_1 = arith.constant 0 : i32
    return %c0_i32, %c0_i32_0 : i32, i32
  }
  func.func @transform_4(%arg0: i32) -> (i32, i32) {
    %c0_i32 = arith.constant 0 : i32
    %c0_i32_0 = arith.constant 0 : i32
    %c0_i32_1 = arith.constant 0 : i32
    return %c0_i32, %c0_i32_0 : i32, i32
  }
  func.func @transform_5(%arg0: i32) -> (i32, i32) {
    %c0_i32 = arith.constant 0 : i32
    %c0_i32_0 = arith.constant 0 : i32
    %c0_i32_1 = arith.constant 0 : i32
    return %c0_i32, %c0_i32_0 : i32, i32
  }
  func.func @transform_6(%arg0: i32) -> (i32, i32) {
    %c0_i32 = arith.constant 0 : i32
    %c0_i32_0 = arith.constant 0 : i32
    %c0_i32_1 = arith.constant 0 : i32
    return %c0_i32, %c0_i32_0 : i32, i32
  }
  func.func @transform_7(%arg0: i32) -> (i32, i32) {
    %c0_i32 = arith.constant 0 : i32
    %c0_i32_0 = arith.constant 0 : i32
    %c0_i32_1 = arith.constant 0 : i32
    return %c0_i32, %c0_i32_0 : i32, i32
  }
  func.func @transform_8(%arg0: i32) -> (i32, i32) {
    %c0_i32 = arith.constant 0 : i32
    %c0_i32_0 = arith.constant 0 : i32
    %c0_i32_1 = arith.constant 0 : i32
    return %c0_i32, %c0_i32_0 : i32, i32
  }
  func.func @transform_9(%arg0: i32) -> (i32, i32) {
    %c0_i32 = arith.constant 0 : i32
    %c0_i32_0 = arith.constant 0 : i32
    return %arg0, %c0_i32 : i32, i32
  }
}

</mosaic_0001>

<llo_original>
// kernel: tpu_custom_call.1
$region0: #{tpu_custom_call.1}
  #allocation0 [shape = 'u32[]', space=smem, size = 0x4, offset = 0x4, fixed_abs, tag = 'smem constant byte address 0x4 - core index']
  #allocation1 [shape = 'u32[72,128]{1,0:T(1,128)}', space=vmem, size = 0x9000, scoped, tag = 'internal scratch']
  %s0 = inlined_call_operand.vmem [shape: f32[16,16], index: 0, kind: input, shape index: {}]
  %s1 = inlined_call_operand.vmem [shape: f32[16,128], index: 1, kind: input, shape index: {}]
  %s2 = inlined_call_operand.vmem [shape: f32[1,128], index: 2, kind: input, shape index: {}]
  %s3 = inlined_call_operand.vmem [shape: f32[128,256], index: 3, kind: input, shape index: {}]
  %s4 = inlined_call_operand.vmem [shape: f32[1,256], index: 4, kind: input, shape index: {}]
  %s5 = inlined_call_operand.vmem [shape: f32[256,544], index: 5, kind: input, shape index: {}]
  %s6 = inlined_call_operand.vmem [shape: f32[1,544], index: 6, kind: input, shape index: {}]
  %s7 = inlined_call_operand.vmem [shape: f32[544,136], index: 7, kind: input, shape index: {}]
  %s8 = inlined_call_operand.vmem [shape: f32[1,136], index: 8, kind: input, shape index: {}]
  %s9 = inlined_call_operand.hbm [shape: f32[16,136], index: 9, kind: output, shape index: {}]
  %s10 = sld [smem:[#allocation0]]
  $region69: #{tpu_custom_call.1} parent=0
    _
  %s12 = ssub.s32 1, %s10
  %s13 = scalar_select 0, %s12, %s10
  $region1: #{tpu_custom_call.1} parent=0
    #allocation2 [shape = 'u8[16384]{0}', space=vmem, size = 0x4000, scoped, tag = 'output window, operand 0']
    #allocation3 [shape = 's32[2]{0}', space=sflag, size = 0x8, scoped, tag = 'scoped memory for tpu_custom_call.1']
    %14 = vsyncpa [#allocation3], 0
    %s15 = scalar_lea.sflag [#allocation3], 1
    %16 = vsyncpa %s15, 0
    loop: start=0, step=1, limit=4
    $region2: #{tpu_custom_call.1} parent=1 // loop_pre_header
      _
    $region3: #{tpu_custom_call.1} parent=1 // loop_header
      %s18 = sphi 0, %s22
      %p19 = scmp.ge.s32.totalorder %s18, 4
      %s28 = sphi 0, %s30
      %s31 = sphi 0, %s28
      %s32 = sphi 0, %s31
      %s48 = sphi 0, %s32
      %s52 = sphi 0, %s52
      %s54 = sphi 0, %s52
      %s55 = sphi 0, %s54
      %s69 = sphi 0, %s55
      %s73 = sphi 0, %s73
      %s75 = sphi 0, %s73
      %s76 = sphi 0, %s75
      %s90 = sphi 0, %s76
      %s94 = sphi 0, %s94
      %s96 = sphi 0, %s94
      %s97 = sphi 0, %s96
      %s111 = sphi 0, %s97
      %s115 = sphi 0, %s115
      %s117 = sphi 0, %s115
      %s118 = sphi 0, %s117
      %s132 = sphi 0, %s118
      %s136 = sphi 0, %s136
      %s138 = sphi 0, %s136
      %s139 = sphi 0, %s138
      %s153 = sphi 0, %s139
      %s157 = sphi 0, %s157
      %s159 = sphi 0, %s157
      %s160 = sphi 0, %s159
      %s174 = sphi 0, %s160
      %s178 = sphi 0, %s178
      %s180 = sphi 0, %s178
      %s181 = sphi 0, %s180
      %s195 = sphi 0, %s181
      %s199 = sphi 0, %s199
      %s201 = sphi 0, %s199
      %s202 = sphi 0, %s201
      %s216 = sphi 0, %s202
      %s222 = sphi 0, %s224
      %s225 = sphi 0, %s222
      %s226 = sphi 0, %s225
      %s242 = sphi 0, %s226
    $region4: #{tpu_custom_call.1} parent=1 // loop_header_branch
      %21 = sbr.rel (%p19) target = $region8
    $region5: #{tpu_custom_call.1} parent=1 // loop_body
      %s23 = ssub.s32 %s18, 1
      %s24 = ssub.s32 %s18, 2
      %s25 = sadd.s32 %s18, 1
      %s26 = ssub.s32 %s18, %s25
      %p27 = scmp.eq.s32.totalorder %s26, 0
      %s29 = sadd.s32 %s28, 1
      %s30 = scalar_select %p27, %s28, %s29
      %p33 = pneg %p27
      %p34 = scmp.eq.s32.totalorder %s18, 1
      %p35 = por %p33, %p34
      %p36 = scmp.ne.s32.totalorder %s28, %s31
      %p37 = scmp.eq.s32.totalorder %s18, 0
      %p38 = por %p36, %p37
      %p39 = scmp.ne.s32.totalorder %s28, %s31
      %p40 = scmp.eq.s32.totalorder %s23, 1
      %p41 = por %p39, %p40
      %p42 = scmp.ne.s32.totalorder %s31, %s32
      %p43 = scmp.eq.s32.totalorder %s23, 0
      %p44 = por %p42, %p43
      %p45 = scmp.ne.s32.totalorder %s31, %s32
      %p46 = scmp.eq.s32.totalorder %s24, 1
      %p47 = por %p45, %p46
      %p49 = scmp.ne.s32.totalorder %s32, %s48
      %p50 = scmp.eq.s32.totalorder %s24, 0
      %p51 = por %p49, %p50
      %s53 = sadd.s32 %s52, 1
      %p56 = scmp.eq.s32.totalorder %s18, 1
      %p57 = scmp.ne.s32.totalorder %s52, %s54
      %p58 = scmp.eq.s32.totalorder %s18, 0
      %p59 = por %p57, %p58
      %p60 = scmp.ne.s32.totalorder %s52, %s54
      %p61 = scmp.eq.s32.totalorder %s23, 1
      %p62 = por %p60, %p61
      %p63 = scmp.ne.s32.totalorder %s54, %s55
      %p64 = scmp.eq.s32.totalorder %s23, 0
      %p65 = por %p63, %p64
      %p66 = scmp.ne.s32.totalorder %s54, %s55
      %p67 = scmp.eq.s32.totalorder %s24, 1
      %p68 = por %p66, %p67
      %p70 = scmp.ne.s32.totalorder %s55, %s69
      %p71 = scmp.eq.s32.totalorder %s24, 0
      %p72 = por %p70, %p71
      %s74 = sadd.s32 %s73, 1
      %p77 = scmp.eq.s32.totalorder %s18, 1
      %p78 = scmp.ne.s32.totalorder %s73, %s75
      %p79 = scmp.eq.s32.totalorder %s18, 0
      %p80 = por %p78, %p79
      %p81 = scmp.ne.s32.totalorder %s73, %s75
      %p82 = scmp.eq.s32.totalorder %s23, 1
      %p83 = por %p81, %p82
      %p84 = scmp.ne.s32.totalorder %s75, %s76
      %p85 = scmp.eq.s32.totalorder %s23, 0
      %p86 = por %p84, %p85
      %p87 = scmp.ne.s32.totalorder %s75, %s76
      %p88 = scmp.eq.s32.totalorder %s24, 1
      %p89 = por %p87, %p88
      %p91 = scmp.ne.s32.totalorder %s76, %s90
      %p92 = scmp.eq.s32.totalorder %s24, 0
      %p93 = por %p91, %p92
      %s95 = sadd.s32 %s94, 1
      %p98 = scmp.eq.s32.totalorder %s18, 1
      %p99 = scmp.ne.s32.totalorder %s94, %s96
      %p100 = scmp.eq.s32.totalorder %s18, 0
      %p101 = por %p99, %p100
      %p102 = scmp.ne.s32.totalorder %s94, %s96
      %p103 = scmp.eq.s32.totalorder %s23, 1
      %p104 = por %p102, %p103
      %p105 = scmp.ne.s32.totalorder %s96, %s97
      %p106 = scmp.eq.s32.totalorder %s23, 0
      %p107 = por %p105, %p106
      %p108 = scmp.ne.s32.totalorder %s96, %s97
      %p109 = scmp.eq.s32.totalorder %s24, 1
      %p110 = por %p108, %p109
      %p112 = scmp.ne.s32.totalorder %s97, %s111
      %p113 = scmp.eq.s32.totalorder %s24, 0
      %p114 = por %p112, %p113
      %s116 = sadd.s32 %s115, 1
      %p119 = scmp.eq.s32.totalorder %s18, 1
      %p120 = scmp.ne.s32.totalorder %s115, %s117
      %p121 = scmp.eq.s32.totalorder %s18, 0
      %p122 = por %p120, %p121
      %p123 = scmp.ne.s32.totalorder %s115, %s117
      %p124 = scmp.eq.s32.totalorder %s23, 1
      %p125 = por %p123, %p124
      %p126 = scmp.ne.s32.totalorder %s117, %s118
      %p127 = scmp.eq.s32.totalorder %s23, 0
      %p128 = por %p126, %p127
      %p129 = scmp.ne.s32.totalorder %s117, %s118
      %p130 = scmp.eq.s32.totalorder %s24, 1
      %p131 = por %p129, %p130
      %p133 = scmp.ne.s32.totalorder %s118, %s132
      %p134 = scmp.eq.s32.totalorder %s24, 0
      %p135 = por %p133, %p134
      %s137 = sadd.s32 %s136, 1
      %p140 = scmp.eq.s32.totalorder %s18, 1
      %p141 = scmp.ne.s32.totalorder %s136, %s138
      %p142 = scmp.eq.s32.totalorder %s18, 0
      %p143 = por %p141, %p142
      %p144 = scmp.ne.s32.totalorder %s136, %s138
      %p145 = scmp.eq.s32.totalorder %s23, 1
      %p146 = por %p144, %p145
      %p147 = scmp.ne.s32.totalorder %s138, %s139
      %p148 = scmp.eq.s32.totalorder %s23, 0
      %p149 = por %p147, %p148
      %p150 = scmp.ne.s32.totalorder %s138, %s139
      %p151 = scmp.eq.s32.totalorder %s24, 1
      %p152 = por %p150, %p151
      %p154 = scmp.ne.s32.totalorder %s139, %s153
      %p155 = scmp.eq.s32.totalorder %s24, 0
      %p156 = por %p154, %p155
      %s158 = sadd.s32 %s157, 1
      %p161 = scmp.eq.s32.totalorder %s18, 1
      %p162 = scmp.ne.s32.totalorder %s157, %s159
      %p163 = scmp.eq.s32.totalorder %s18, 0
      %p164 = por %p162, %p163
      %p165 = scmp.ne.s32.totalorder %s157, %s159
      %p166 = scmp.eq.s32.totalorder %s23, 1
      %p167 = por %p165, %p166
      %p168 = scmp.ne.s32.totalorder %s159, %s160
      %p169 = scmp.eq.s32.totalorder %s23, 0
      %p170 = por %p168, %p169
      %p171 = scmp.ne.s32.totalorder %s159, %s160
      %p172 = scmp.eq.s32.totalorder %s24, 1
      %p173 = por %p171, %p172
      %p175 = scmp.ne.s32.totalorder %s160, %s174
      %p176 = scmp.eq.s32.totalorder %s24, 0
      %p177 = por %p175, %p176
      %s179 = sadd.s32 %s178, 1
      %p182 = scmp.eq.s32.totalorder %s18, 1
      %p183 = scmp.ne.s32.totalorder %s178, %s180
      %p184 = scmp.eq.s32.totalorder %s18, 0
      %p185 = por %p183, %p184
      %p186 = scmp.ne.s32.totalorder %s178, %s180
      %p187 = scmp.eq.s32.totalorder %s23, 1
      %p188 = por %p186, %p187
      %p189 = scmp.ne.s32.totalorder %s180, %s181
      %p190 = scmp.eq.s32.totalorder %s23, 0
      %p191 = por %p189, %p190
      %p192 = scmp.ne.s32.totalorder %s180, %s181
      %p193 = scmp.eq.s32.totalorder %s24, 1
      %p194 = por %p192, %p193
      %p196 = scmp.ne.s32.totalorder %s181, %s195
      %p197 = scmp.eq.s32.totalorder %s24, 0
      %p198 = por %p196, %p197
      %s200 = sadd.s32 %s199, 1
      %p203 = scmp.eq.s32.totalorder %s18, 1
      %p204 = scmp.ne.s32.totalorder %s199, %s201
      %p205 = scmp.eq.s32.totalorder %s18, 0
      %p206 = por %p204, %p205
      %p207 = scmp.ne.s32.totalorder %s199, %s201
      %p208 = scmp.eq.s32.totalorder %s23, 1
      %p209 = por %p207, %p208
      %p210 = scmp.ne.s32.totalorder %s201, %s202
      %p211 = scmp.eq.s32.totalorder %s23, 0
      %p212 = por %p210, %p211
      %p213 = scmp.ne.s32.totalorder %s201, %s202
      %p214 = scmp.eq.s32.totalorder %s24, 1
      %p215 = por %p213, %p214
      %p217 = scmp.ne.s32.totalorder %s202, %s216
      %p218 = scmp.eq.s32.totalorder %s24, 0
      %p219 = por %p217, %p218
      %s220 = ssub.s32 %s18, %s25
      %p221 = scmp.eq.s32.totalorder %s220, 0
      %s223 = sadd.s32 %s222, 1
      %s224 = scalar_select %p221, %s222, %s223
      %p227 = pneg %p221
      %p228 = scmp.eq.s32.totalorder %s18, 1
      %p229 = por %p227, %p228
      %p230 = scmp.ne.s32.totalorder %s222, %s225
      %p231 = scmp.eq.s32.totalorder %s18, 0
      %p232 = por %p230, %p231
      %p233 = scmp.ne.s32.totalorder %s222, %s225
      %p234 = scmp.eq.s32.totalorder %s23, 1
      %p235 = por %p233, %p234
      %p236 = scmp.ne.s32.totalorder %s225, %s226
      %p237 = scmp.eq.s32.totalorder %s23, 0
      %p238 = por %p236, %p237
      %p239 = scmp.ne.s32.totalorder %s225, %s226
      %p240 = scmp.eq.s32.totalorder %s24, 1
      %p241 = por %p239, %p240
      %p243 = scmp.ne.s32.totalorder %s226, %s242
      %p244 = scmp.eq.s32.totalorder %s24, 0
      %p245 = por %p243, %p244
      %p246 = scmp.le.s32.totalorder 1, %s18
      %p247 = scmp.lt.s32.totalorder %s18, 3
      %p248 = pnand %p246, %p247
      %p249 = pneg %p248
      // Predicated region
      $region9: #{tpu_custom_call.1} parent=5 // pred_check
        _
      $region10: #{tpu_custom_call.1} parent=5 // pred_check_branch
        %251 = sbr.rel (%p248) target = $region12
      $region11: #{tpu_custom_call.1} parent=5 // pred_region
        %s252 = ssub.s32 %s18, 1
        // Predicated region
        $region13: #{tpu_custom_call.1} parent=11 // pred_check
          %p253 = pneg %p65
        $region14: #{tpu_custom_call.1} parent=11 // pred_check_branch
          %255 = sbr.rel (%p253) target = $region16
        $region15: #{tpu_custom_call.1} parent=11 // pred_region
          _
        $region16: #{tpu_custom_call.1} parent=11 // pred_fallthru
          _
        // Predicated region
        $region17: #{tpu_custom_call.1} parent=11 // pred_check
          %p256 = pneg %p86
        $region18: #{tpu_custom_call.1} parent=11 // pred_check_branch
          %258 = sbr.rel (%p256) target = $region20
        $region19: #{tpu_custom_call.1} parent=11 // pred_region
          _
        $region20: #{tpu_custom_call.1} parent=11 // pred_fallthru
          _
        // Predicated region
        $region21: #{tpu_custom_call.1} parent=11 // pred_check
          %p259 = pneg %p107
        $region22: #{tpu_custom_call.1} parent=11 // pred_check_branch
          %261 = sbr.rel (%p259) target = $region24
        $region23: #{tpu_custom_call.1} parent=11 // pred_region
          _
        $region24: #{tpu_custom_call.1} parent=11 // pred_fallthru
          _
        // Predicated region
        $region25: #{tpu_custom_call.1} parent=11 // pred_check
          %p262 = pneg %p128
        $region26: #{tpu_custom_call.1} parent=11 // pred_check_branch
          %264 = sbr.rel (%p262) target = $region28
        $region27: #{tpu_custom_call.1} parent=11 // pred_region
          _
        $region28: #{tpu_custom_call.1} parent=11 // pred_fallthru
          _
        // Predicated region
        $region29: #{tpu_custom_call.1} parent=11 // pred_check
          %p265 = pneg %p149
        $region30: #{tpu_custom_call.1} parent=11 // pred_check_branch
          %267 = sbr.rel (%p265) target = $region32
        $region31: #{tpu_custom_call.1} parent=11 // pred_region
          _
        $region32: #{tpu_custom_call.1} parent=11 // pred_fallthru
          _
        // Predicated region
        $region33: #{tpu_custom_call.1} parent=11 // pred_check
          %p268 = pneg %p170
        $region34: #{tpu_custom_call.1} parent=11 // pred_check_branch
          %270 = sbr.rel (%p268) target = $region36
        $region35: #{tpu_custom_call.1} parent=11 // pred_region
          _
        $region36: #{tpu_custom_call.1} parent=11 // pred_fallthru
          _
        // Predicated region
        $region37: #{tpu_custom_call.1} parent=11 // pred_check
          %p271 = pneg %p191
        $region38: #{tpu_custom_call.1} parent=11 // pred_check_branch
          %273 = sbr.rel (%p271) target = $region40
        $region39: #{tpu_custom_call.1} parent=11 // pred_region
          _
        $region40: #{tpu_custom_call.1} parent=11 // pred_fallthru
          _
        // Predicated region
        $region41: #{tpu_custom_call.1} parent=11 // pred_check
          %p274 = pneg %p212
        $region42: #{tpu_custom_call.1} parent=11 // pred_check_branch
          %276 = sbr.rel (%p274) target = $region44
        $region43: #{tpu_custom_call.1} parent=11 // pred_region
          _
        $region44: #{tpu_custom_call.1} parent=11 // pred_fallthru
          _
      $region12: #{tpu_custom_call.1} parent=5 // pred_fallthru
        _
      %p277 = scmp.lt.s32.totalorder %s18, 2
      // Predicated region
      $region45: #{tpu_custom_call.1} parent=5 // pred_check
        %p278 = pneg %p277
      $region46: #{tpu_custom_call.1} parent=5 // pred_check_branch
        %280 = sbr.rel (%p278) target = $region48
      $region47: #{tpu_custom_call.1} parent=5 // pred_region
        // Predicated region
        $region49: #{tpu_custom_call.1} parent=47 // pred_check
          %p281 = pneg %p38
        $region50: #{tpu_custom_call.1} parent=47 // pred_check_branch
          %283 = sbr.rel (%p281) target = $region52
        $region51: #{tpu_custom_call.1} parent=47 // pred_region
          %p284 = scmp.lt.s32.totalorder %s18, 1
          %s285 = scalar_select %p284, %s18, 1
          %s286 = smul.addr %s285, 8
          %s287 = scalar_lea.vmem %s0, %s286
        $region52: #{tpu_custom_call.1} parent=47 // pred_fallthru
          _
      $region48: #{tpu_custom_call.1} parent=5 // pred_fallthru
        _
      %p288 = scmp.le.s32.totalorder 1, %s18
      %p289 = scmp.lt.s32.totalorder %s18, 3
      %p290 = pnand %p288, %p289
      %p291 = pneg %p290
      // Predicated region
      $region53: #{tpu_custom_call.1} parent=5 // pred_check
        _
      $region54: #{tpu_custom_call.1} parent=5 // pred_check_branch
        %293 = sbr.rel (%p290) target = $region56
      $region55: #{tpu_custom_call.1} parent=5 // pred_region
        %s294 = ssub.s32 %s18, 1
        %p295 = scmp.lt.s32.totalorder %s23, 1
        %s296 = scalar_select %p295, %s23, 1
        %s297 = smul.addr %s296, 8
        %s298 = scalar_lea.vmem %s0, %s297
        %p299 = pneg %p44
        %p300 = pneg %p41
        %p301 = pneg %p65
        %p302 = pneg %p62
        %p303 = pneg %p86
        %p304 = pneg %p83
        %p305 = pneg %p107
        %p306 = pneg %p104
        %p307 = pneg %p128
        %p308 = pneg %p125
        %p309 = pneg %p149
        %p310 = pneg %p146
        %p311 = pneg %p170
        %p312 = pneg %p167
        %p313 = pneg %p191
        %p314 = pneg %p188
        %p315 = pneg %p212
        %p316 = pneg %p209
        %p317 = pneg %p238
        %p318 = pneg %p235
        %s319 = sand.u32 %s225, 1
        %s320 = scalar_lea.sflag [#allocation3], %s319
        %s321 = sand.u32 %s225, 1
        %s322 = smul.addr %s321, 16
        %s323 = scalar_lea.vmem [#allocation2], %s322
        %p324 = scmp.lt.s32.totalorder %s23, 1
        %s325 = scalar_select %p324, %s23, 1
        %s326 = smul.addr %s325, 8
        %s327 = scalar_lea.vmem %s0, %s326
        %v328 = vld [vmem:[%s327] sm:$0xff]
        %v329 = vld [vmem:[%s1] sm:$0xff]
        %v330 = vld [vmem:[%s1 + $0x8] sm:$0xff]
        %v331 = vld [vmem:[%s2] sm:$0x1]
        %v333 = vperm.slane %v331, 0
        %vm335 = vcmask 130048
        %v337 = vsel %vm335, %v328, 0
        %339 = vmatpush.msra.mxu0 0.0
        %340 = vmatpush.msra.mxu0 0.0
        %341 = vmatpush.msra.mxu0 0.0
        %342 = vmatpush.msra.mxu0 0.0
        %343 = vmatpush.msra.mxu0 0.0
        %344 = vmatpush.msra.mxu0 0.0
        %345 = vmatpush.msra.mxu0 0.0
        %346 = vmatpush.msra.mxu0 0.0
        %347 = vmatpush.msra.mxu0 0.0
        %348 = vmatpush.msra.mxu0 0.0
        %349 = vmatpush.msra.mxu0 0.0
        %350 = vmatpush.msra.mxu0 0.0
        %351 = vmatpush.msra.mxu0 0.0
        %352 = vmatpush.msra.mxu0 0.0
        %353 = vmatpush.msra.mxu0 %v330
        %354 = vmatpush.msra.mxu0 %v329
        %355 = vmatmul.f32.gmra.mxu0 %v337
        %v356 = vpop.f32.mrf.mxu0
        %v357 = vadd.f32 %v333, %v356
        %358 = vdwg.mxu0
        %v359 = vmax.f32 %v357, 0.0
        %v360 = vld [vmem:[%s3] sm:$0xff]
        %v361 = vld [vmem:[%s3 + $0x8] sm:$0xff]
        %v362 = vld [vmem:[%s3 + $0x10] sm:$0xff]
        %v363 = vld [vmem:[%s3 + $0x18] sm:$0xff]
        %v364 = vld [vmem:[%s3 + $0x20] sm:$0xff]
        %v365 = vld [vmem:[%s3 + $0x28] sm:$0xff]
        %v366 = vld [vmem:[%s3 + $0x30] sm:$0xff]
        %v367 = vld [vmem:[%s3 + $0x38] sm:$0xff]
        %v368 = vld [vmem:[%s3 + $0x40] sm:$0xff]
        %v369 = vld [vmem:[%s3 + $0x48] sm:$0xff]
        %v370 = vld [vmem:[%s3 + $0x50] sm:$0xff]
        %v371 = vld [vmem:[%s3 + $0x58] sm:$0xff]
        %v372 = vld [vmem:[%s3 + $0x60] sm:$0xff]
        %v373 = vld [vmem:[%s3 + $0x68] sm:$0xff]
        %v374 = vld [vmem:[%s3 + $0x70] sm:$0xff]
        %v375 = vld [vmem:[%s3 + $0x78] sm:$0xff]
        %v376 = vld [vmem:[%s3 + $0x80] sm:$0xff]
        %v377 = vld [vmem:[%s3 + $0x88] sm:$0xff]
        %v378 = vld [vmem:[%s3 + $0x90] sm:$0xff]
        %v379 = vld [vmem:[%s3 + $0x98] sm:$0xff]
        %v380 = vld [vmem:[%s3 + $0xa0] sm:$0xff]
        %v381 = vld [vmem:[%s3 + $0xa8] sm:$0xff]
        %v382 = vld [vmem:[%s3 + $0xb0] sm:$0xff]
        %v383 = vld [vmem:[%s3 + $0xb8] sm:$0xff]
        %v384 = vld [vmem:[%s3 + $0xc0] sm:$0xff]
        %v385 = vld [vmem:[%s3 + $0xc8] sm:$0xff]
        %v386 = vld [vmem:[%s3 + $0xd0] sm:$0xff]
        %v387 = vld [vmem:[%s3 + $0xd8] sm:$0xff]
        %v388 = vld [vmem:[%s3 + $0xe0] sm:$0xff]
        %v389 = vld [vmem:[%s3 + $0xe8] sm:$0xff]
        %v390 = vld [vmem:[%s3 + $0xf0] sm:$0xff]
        %v391 = vld [vmem:[%s3 + $0xf8] sm:$0xff]
        %v392 = vld [vmem:[%s4] sm:$0x3]
        %v394 = vperm.slane %v392, 0
        %v395 = vperm.slane %v392, 1
        %398 = vmatpush.msra.mxu0 %v390
        %399 = vmatpush.msra.mxu0 %v388
        %400 = vmatpush.msra.mxu0 %v386
        %401 = vmatpush.msra.mxu0 %v384
        %402 = vmatpush.msra.mxu0 %v382
        %403 = vmatpush.msra.mxu0 %v380
        %404 = vmatpush.msra.mxu0 %v378
        %405 = vmatpush.msra.mxu0 %v376
        %406 = vmatpush.msra.mxu0 %v374
        %407 = vmatpush.msra.mxu0 %v372
        %408 = vmatpush.msra.mxu0 %v370
        %409 = vmatpush.msra.mxu0 %v368
        %410 = vmatpush.msra.mxu0 %v366
        %411 = vmatpush.msra.mxu0 %v364
        %412 = vmatpush.msra.mxu0 %v362
        %413 = vmatpush.msra.mxu0 %v360
        %414 = vmatmul.f32.gmra.mxu0 %v359
        %v415 = vpop.f32.mrf.mxu0
        %v416 = vadd.f32 %v394, %v415
        %417 = vdwg.mxu0
        %418 = vmatpush.msra.mxu0 %v391
        %419 = vmatpush.msra.mxu0 %v389
        %420 = vmatpush.msra.mxu0 %v387
        %421 = vmatpush.msra.mxu0 %v385
        %422 = vmatpush.msra.mxu0 %v383
        %423 = vmatpush.msra.mxu0 %v381
        %424 = vmatpush.msra.mxu0 %v379
        %425 = vmatpush.msra.mxu0 %v377
        %426 = vmatpush.msra.mxu0 %v375
        %427 = vmatpush.msra.mxu0 %v373
        %428 = vmatpush.msra.mxu0 %v371
        %429 = vmatpush.msra.mxu0 %v369
        %430 = vmatpush.msra.mxu0 %v367
        %431 = vmatpush.msra.mxu0 %v365
        %432 = vmatpush.msra.mxu0 %v363
        %433 = vmatpush.msra.mxu0 %v361
        %434 = vmatmul.f32.gmra.mxu0 %v359
        %v435 = vpop.f32.mrf.mxu0
        %v436 = vadd.f32 %v395, %v435
        %437 = vdwg.mxu0
        %v438 = vmax.f32 %v416, 0.0
        %v439 = vmax.f32 %v436, 0.0
        %v440 = vld [vmem:[%s5] sm:$0xff]
        %v441 = vld [vmem:[%s5 + $0x8] sm:$0xff]
        %v442 = vld [vmem:[%s5 + $0x10] sm:$0xff]
        %v443 = vld [vmem:[%s5 + $0x18] sm:$0xff]
        %v444 = vld [vmem:[%s5 + $0x20] sm:$0xff]
        %v445 = vld [vmem:[%s5 + $0x28] sm:$0xff]
        %v446 = vld [vmem:[%s5 + $0x30] sm:$0xff]
        %v447 = vld [vmem:[%s5 + $0x38] sm:$0xff]
        %v448 = vld [vmem:[%s5 + $0x40] sm:$0xff]
        %v449 = vld [vmem:[%s5 + $0x48] sm:$0xff]
        %v450 = vld [vmem:[%s5 + $0x50] sm:$0xff]
        %v451 = vld [vmem:[%s5 + $0x58] sm:$0xff]
        %v452 = vld [vmem:[%s5 + $0x60] sm:$0xff]
        %v453 = vld [vmem:[%s5 + $0x68] sm:$0xff]
        %v454 = vld [vmem:[%s5 + $0x70] sm:$0xff]
        %v455 = vld [vmem:[%s5 + $0x78] sm:$0xff]
        %v456 = vld [vmem:[%s5 + $0x80] sm:$0xff]
        %v457 = vld [vmem:[%s5 + $0x88] sm:$0xff]
        %v458 = vld [vmem:[%s5 + $0x90] sm:$0xff]
        %v459 = vld [vmem:[%s5 + $0x98] sm:$0xff]
        %v460 = vld [vmem:[%s5 + $0xa0] sm:$0xff]
        %v461 = vld [vmem:[%s5 + $0xa8] sm:$0xff]
        %v462 = vld [vmem:[%s5 + $0xb0] sm:$0xff]
        %v463 = vld [vmem:[%s5 + $0xb8] sm:$0xff]
        %v464 = vld [vmem:[%s5 + $0xc0] sm:$0xff]
        %v465 = vld [vmem:[%s5 + $0xc8] sm:$0xff]
        %v466 = vld [vmem:[%s5 + $0xd0] sm:$0xff]
        %v467 = vld [vmem:[%s5 + $0xd8] sm:$0xff]
        %v468 = vld [vmem:[%s5 + $0xe0] sm:$0xff]
        %v469 = vld [vmem:[%s5 + $0xe8] sm:$0xff]
        %v470 = vld [vmem:[%s5 + $0xf0] sm:$0xff]
        %v471 = vld [vmem:[%s5 + $0xf8] sm:$0xff]
        %v472 = vld [vmem:[%s5 + $0x100] sm:$0xff]
        %v473 = vld [vmem:[%s5 + $0x108] sm:$0xff]
        %v474 = vld [vmem:[%s5 + $0x110] sm:$0xff]
        %v475 = vld [vmem:[%s5 + $0x118] sm:$0xff]
        %v476 = vld [vmem:[%s5 + $0x120] sm:$0xff]
        %v477 = vld [vmem:[%s5 + $0x128] sm:$0xff]
        %v478 = vld [vmem:[%s5 + $0x130] sm:$0xff]
        %v479 = vld [vmem:[%s5 + $0x138] sm:$0xff]
        %v480 = vld [vmem:[%s5 + $0x140] sm:$0xff]
        %v481 = vld [vmem:[%s5 + $0x148] sm:$0xff]
        %v482 = vld [vmem:[%s5 + $0x150] sm:$0xff]
        %v483 = vld [vmem:[%s5 + $0x158] sm:$0xff]
        %v484 = vld [vmem:[%s5 + $0x160] sm:$0xff]
        %v485 = vld [vmem:[%s5 + $0x168] sm:$0xff]
        %v486 = vld [vmem:[%s5 + $0x170] sm:$0xff]
        %v487 = vld [vmem:[%s5 + $0x178] sm:$0xff]
        %v488 = vld [vmem:[%s5 + $0x180] sm:$0xff]
        %v489 = vld [vmem:[%s5 + $0x188] sm:$0xff]
        %v490 = vld [vmem:[%s5 + $0x190] sm:$0xff]
        %v491 = vld [vmem:[%s5 + $0x198] sm:$0xff]
        %v492 = vld [vmem:[%s5 + $0x1a0] sm:$0xff]
        %v493 = vld [vmem:[%s5 + $0x1a8] sm:$0xff]
        %v494 = vld [vmem:[%s5 + $0x1b0] sm:$0xff]
        %v495 = vld [vmem:[%s5 + $0x1b8] sm:$0xff]
        %v496 = vld [vmem:[%s5 + $0x1c0] sm:$0xff]
        %v497 = vld [vmem:[%s5 + $0x1c8] sm:$0xff]
        %v498 = vld [vmem:[%s5 + $0x1d0] sm:$0xff]
        %v499 = vld [vmem:[%s5 + $0x1d8] sm:$0xff]
        %v500 = vld [vmem:[%s5 + $0x1e0] sm:$0xff]
        %v501 = vld [vmem:[%s5 + $0x1e8] sm:$0xff]
        %v502 = vld [vmem:[%s5 + $0x1f0] sm:$0xff]
        %v503 = vld [vmem:[%s5 + $0x1f8] sm:$0xff]
        %v504 = vld [vmem:[%s5 + $0x200] sm:$0xff]
        %v505 = vld [vmem:[%s5 + $0x208] sm:$0xff]
        %v506 = vld [vmem:[%s5 + $0x210] sm:$0xff]
        %v507 = vld [vmem:[%s5 + $0x218] sm:$0xff]
        %v508 = vld [vmem:[%s5 + $0x220] sm:$0xff]
        %v509 = vld [vmem:[%s5 + $0x228] sm:$0xff]
        %v510 = vld [vmem:[%s5 + $0x230] sm:$0xff]
        %v511 = vld [vmem:[%s5 + $0x238] sm:$0xff]
        %v512 = vld [vmem:[%s5 + $0x240] sm:$0xff]
        %v513 = vld [vmem:[%s5 + $0x248] sm:$0xff]
        %v514 = vld [vmem:[%s5 + $0x250] sm:$0xff]
        %v515 = vld [vmem:[%s5 + $0x258] sm:$0xff]
        %v516 = vld [vmem:[%s5 + $0x260] sm:$0xff]
        %v517 = vld [vmem:[%s5 + $0x268] sm:$0xff]
        %v518 = vld [vmem:[%s5 + $0x270] sm:$0xff]
        %v519 = vld [vmem:[%s5 + $0x278] sm:$0xff]
        %v520 = vld [vmem:[%s5 + $0x280] sm:$0xff]
        %v521 = vld [vmem:[%s5 + $0x288] sm:$0xff]
        %v522 = vld [vmem:[%s5 + $0x290] sm:$0xff]
        %v523 = vld [vmem:[%s5 + $0x298] sm:$0xff]
        %v524 = vld [vmem:[%s5 + $0x2a0] sm:$0xff]
        %v525 = vld [vmem:[%s5 + $0x2a8] sm:$0xff]
        %v526 = vld [vmem:[%s5 + $0x2b0] sm:$0xff]
        %v527 = vld [vmem:[%s5 + $0x2b8] sm:$0xff]
        %v528 = vld [vmem:[%s5 + $0x2c0] sm:$0xff]
        %v529 = vld [vmem:[%s5 + $0x2c8] sm:$0xff]
        %v530 = vld [vmem:[%s5 + $0x2d0] sm:$0xff]
        %v531 = vld [vmem:[%s5 + $0x2d8] sm:$0xff]
        %v532 = vld [vmem:[%s5 + $0x2e0] sm:$0xff]
        %v533 = vld [vmem:[%s5 + $0x2e8] sm:$0xff]
        %v534 = vld [vmem:[%s5 + $0x2f0] sm:$0xff]
        %v535 = vld [vmem:[%s5 + $0x2f8] sm:$0xff]
        %v536 = vld [vmem:[%s5 + $0x300] sm:$0xff]
        %v537 = vld [vmem:[%s5 + $0x308] sm:$0xff]
        %v538 = vld [vmem:[%s5 + $0x310] sm:$0xff]
        %v539 = vld [vmem:[%s5 + $0x318] sm:$0xff]
        %v540 = vld [vmem:[%s5 + $0x320] sm:$0xff]
        %v541 = vld [vmem:[%s5 + $0x328] sm:$0xff]
        %v542 = vld [vmem:[%s5 + $0x330] sm:$0xff]
        %v543 = vld [vmem:[%s5 + $0x338] sm:$0xff]
        %v544 = vld [vmem:[%s5 + $0x340] sm:$0xff]
        %v545 = vld [vmem:[%s5 + $0x348] sm:$0xff]
        %v546 = vld [vmem:[%s5 + $0x350] sm:$0xff]
        %v547 = vld [vmem:[%s5 + $0x358] sm:$0xff]
        %v548 = vld [vmem:[%s5 + $0x360] sm:$0xff]
        %v549 = vld [vmem:[%s5 + $0x368] sm:$0xff]
        %v550 = vld [vmem:[%s5 + $0x370] sm:$0xff]
        %v551 = vld [vmem:[%s5 + $0x378] sm:$0xff]
        %v552 = vld [vmem:[%s5 + $0x380] sm:$0xff]
        %v553 = vld [vmem:[%s5 + $0x388] sm:$0xff]
        %v554 = vld [vmem:[%s5 + $0x390] sm:$0xff]
        %v555 = vld [vmem:[%s5 + $0x398] sm:$0xff]
        %v556 = vld [vmem:[%s5 + $0x3a0] sm:$0xff]
        %v557 = vld [vmem:[%s5 + $0x3a8] sm:$0xff]
        %v558 = vld [vmem:[%s5 + $0x3b0] sm:$0xff]
        %v559 = vld [vmem:[%s5 + $0x3b8] sm:$0xff]
        %v560 = vld [vmem:[%s5 + $0x3c0] sm:$0xff]
        %v561 = vld [vmem:[%s5 + $0x3c8] sm:$0xff]
        %v562 = vld [vmem:[%s5 + $0x3d0] sm:$0xff]
        %v563 = vld [vmem:[%s5 + $0x3d8] sm:$0xff]
        %v564 = vld [vmem:[%s5 + $0x3e0] sm:$0xff]
        %v565 = vld [vmem:[%s5 + $0x3e8] sm:$0xff]
        %v566 = vld [vmem:[%s5 + $0x3f0] sm:$0xff]
        %v567 = vld [vmem:[%s5 + $0x3f8] sm:$0xff]
        %v568 = vld [vmem:[%s5 + $0x400] sm:$0xff]
        %v569 = vld [vmem:[%s5 + $0x408] sm:$0xff]
        %v570 = vld [vmem:[%s5 + $0x410] sm:$0xff]
        %v571 = vld [vmem:[%s5 + $0x418] sm:$0xff]
        %v572 = vld [vmem:[%s5 + $0x420] sm:$0xff]
        %v573 = vld [vmem:[%s5 + $0x428] sm:$0xff]
        %v574 = vld [vmem:[%s5 + $0x430] sm:$0xff]
        %v575 = vld [vmem:[%s5 + $0x438] sm:$0xff]
        %v576 = vld [vmem:[%s5 + $0x440] sm:$0xff]
        %v577 = vld [vmem:[%s5 + $0x448] sm:$0xff]
        %v578 = vld [vmem:[%s5 + $0x450] sm:$0xff]
        %v579 = vld [vmem:[%s5 + $0x458] sm:$0xff]
        %v580 = vld [vmem:[%s5 + $0x460] sm:$0xff]
        %v581 = vld [vmem:[%s5 + $0x468] sm:$0xff]
        %v582 = vld [vmem:[%s5 + $0x470] sm:$0xff]
        %v583 = vld [vmem:[%s5 + $0x478] sm:$0xff]
        %v584 = vld [vmem:[%s5 + $0x480] sm:$0xff]
        %v585 = vld [vmem:[%s5 + $0x488] sm:$0xff]
        %v586 = vld [vmem:[%s5 + $0x490] sm:$0xff]
        %v587 = vld [vmem:[%s5 + $0x498] sm:$0xff]
        %v588 = vld [vmem:[%s5 + $0x4a0] sm:$0xff]
        %v589 = vld [vmem:[%s5 + $0x4a8] sm:$0xff]
        %v590 = vld [vmem:[%s5 + $0x4b0] sm:$0xff]
        %v591 = vld [vmem:[%s5 + $0x4b8] sm:$0xff]
        %v592 = vld [vmem:[%s5 + $0x4c0] sm:$0xff]
        %v593 = vld [vmem:[%s5 + $0x4c8] sm:$0xff]
        %v594 = vld [vmem:[%s5 + $0x4d0] sm:$0xff]
        %v595 = vld [vmem:[%s5 + $0x4d8] sm:$0xff]
        %v596 = vld [vmem:[%s5 + $0x4e0] sm:$0xff]
        %v597 = vld [vmem:[%s5 + $0x4e8] sm:$0xff]
        %v598 = vld [vmem:[%s5 + $0x4f0] sm:$0xff]
        %v599 = vld [vmem:[%s5 + $0x4f8] sm:$0xff]
        %v600 = vld [vmem:[%s6] sm:$0x1f]
        %v602 = vperm.slane %v600, 0
        %v603 = vperm.slane %v600, 1
        %v604 = vperm.slane %v600, 2
        %v605 = vperm.slane %v600, 3
        %v606 = vperm.slane %v600, 4
        %612 = vmatpush.msra.mxu0 %v515
        %613 = vmatpush.msra.mxu0 %v510
        %614 = vmatpush.msra.mxu0 %v505
        %615 = vmatpush.msra.mxu0 %v500
        %616 = vmatpush.msra.mxu0 %v495
        %617 = vmatpush.msra.mxu0 %v490
        %618 = vmatpush.msra.mxu0 %v485
        %619 = vmatpush.msra.mxu0 %v480
        %620 = vmatpush.msra.mxu0 %v475
        %621 = vmatpush.msra.mxu0 %v470
        %622 = vmatpush.msra.mxu0 %v465
        %623 = vmatpush.msra.mxu0 %v460
        %624 = vmatpush.msra.mxu0 %v455
        %625 = vmatpush.msra.mxu0 %v450
        %626 = vmatpush.msra.mxu0 %v445
        %627 = vmatpush.msra.mxu0 %v440
        %628 = vmatmul.f32.gmra.mxu0 %v438
        %v629 = vpop.f32.mrf.mxu0
        %v630 = vadd.f32 %v602, %v629
        %631 = vdwg.mxu0
        %632 = vmatpush.msra.mxu0 %v595
        %633 = vmatpush.msra.mxu0 %v590
        %634 = vmatpush.msra.mxu0 %v585
        %635 = vmatpush.msra.mxu0 %v580
        %636 = vmatpush.msra.mxu0 %v575
        %637 = vmatpush.msra.mxu0 %v570
        %638 = vmatpush.msra.mxu0 %v565
        %639 = vmatpush.msra.mxu0 %v560
        %640 = vmatpush.msra.mxu0 %v555
        %641 = vmatpush.msra.mxu0 %v550
        %642 = vmatpush.msra.mxu0 %v545
        %643 = vmatpush.msra.mxu0 %v540
        %644 = vmatpush.msra.mxu0 %v535
        %645 = vmatpush.msra.mxu0 %v530
        %646 = vmatpush.msra.mxu0 %v525
        %647 = vmatpush.msra.mxu0 %v520
        %648 = vmatmul.f32.gmra.mxu0 %v439
        %v649 = vpop.f32.mrf.mxu0
        %v650 = vadd.f32 %v630, %v649
        %651 = vdwg.mxu0
        %652 = vmatpush.msra.mxu0 %v516
        %653 = vmatpush.msra.mxu0 %v511
        %654 = vmatpush.msra.mxu0 %v506
        %655 = vmatpush.msra.mxu0 %v501
        %656 = vmatpush.msra.mxu0 %v496
        %657 = vmatpush.msra.mxu0 %v491
        %658 = vmatpush.msra.mxu0 %v486
        %659 = vmatpush.msra.mxu0 %v481
        %660 = vmatpush.msra.mxu0 %v476
        %661 = vmatpush.msra.mxu0 %v471
        %662 = vmatpush.msra.mxu0 %v466
        %663 = vmatpush.msra.mxu0 %v461
        %664 = vmatpush.msra.mxu0 %v456
        %665 = vmatpush.msra.mxu0 %v451
        %666 = vmatpush.msra.mxu0 %v446
        %667 = vmatpush.msra.mxu0 %v441
        %668 = vmatmul.f32.gmra.mxu0 %v438
        %v669 = vpop.f32.mrf.mxu0
        %v670 = vadd.f32 %v603, %v669
        %671 = vdwg.mxu0
        %672 = vmatpush.msra.mxu0 %v596
        %673 = vmatpush.msra.mxu0 %v591
        %674 = vmatpush.msra.mxu0 %v586
        %675 = vmatpush.msra.mxu0 %v581
        %676 = vmatpush.msra.mxu0 %v576
        %677 = vmatpush.msra.mxu0 %v571
        %678 = vmatpush.msra.mxu0 %v566
        %679 = vmatpush.msra.mxu0 %v561
        %680 = vmatpush.msra.mxu0 %v556
        %681 = vmatpush.msra.mxu0 %v551
        %682 = vmatpush.msra.mxu0 %v546
        %683 = vmatpush.msra.mxu0 %v541
        %684 = vmatpush.msra.mxu0 %v536
        %685 = vmatpush.msra.mxu0 %v531
        %686 = vmatpush.msra.mxu0 %v526
        %687 = vmatpush.msra.mxu0 %v521
        %688 = vmatmul.f32.gmra.mxu0 %v439
        %v689 = vpop.f32.mrf.mxu0
        %v690 = vadd.f32 %v670, %v689
        %691 = vdwg.mxu0
        %692 = vmatpush.msra.mxu0 %v517
        %693 = vmatpush.msra.mxu0 %v512
        %694 = vmatpush.msra.mxu0 %v507
        %695 = vmatpush.msra.mxu0 %v502
        %696 = vmatpush.msra.mxu0 %v497
        %697 = vmatpush.msra.mxu0 %v492
        %698 = vmatpush.msra.mxu0 %v487
        %699 = vmatpush.msra.mxu0 %v482
        %700 = vmatpush.msra.mxu0 %v477
        %701 = vmatpush.msra.mxu0 %v472
        %702 = vmatpush.msra.mxu0 %v467
        %703 = vmatpush.msra.mxu0 %v462
        %704 = vmatpush.msra.mxu0 %v457
        %705 = vmatpush.msra.mxu0 %v452
        %706 = vmatpush.msra.mxu0 %v447
        %707 = vmatpush.msra.mxu0 %v442
        %708 = vmatmul.f32.gmra.mxu0 %v438
        %v709 = vpop.f32.mrf.mxu0
        %v710 = vadd.f32 %v604, %v709
        %711 = vdwg.mxu0
        %712 = vmatpush.msra.mxu0 %v597
        %713 = vmatpush.msra.mxu0 %v592
        %714 = vmatpush.msra.mxu0 %v587
        %715 = vmatpush.msra.mxu0 %v582
        %716 = vmatpush.msra.mxu0 %v577
        %717 = vmatpush.msra.mxu0 %v572
        %718 = vmatpush.msra.mxu0 %v567
        %719 = vmatpush.msra.mxu0 %v562
        %720 = vmatpush.msra.mxu0 %v557
        %721 = vmatpush.msra.mxu0 %v552
        %722 = vmatpush.msra.mxu0 %v547
        %723 = vmatpush.msra.mxu0 %v542
        %724 = vmatpush.msra.mxu0 %v537
        %725 = vmatpush.msra.mxu0 %v532
        %726 = vmatpush.msra.mxu0 %v527
        %727 = vmatpush.msra.mxu0 %v522
        %728 = vmatmul.f32.gmra.mxu0 %v439
        %v729 = vpop.f32.mrf.mxu0
        %v730 = vadd.f32 %v710, %v729
        %731 = vdwg.mxu0
        %732 = vmatpush.msra.mxu0 %v518
        %733 = vmatpush.msra.mxu0 %v513
        %734 = vmatpush.msra.mxu0 %v508
        %735 = vmatpush.msra.mxu0 %v503
        %736 = vmatpush.msra.mxu0 %v498
        %737 = vmatpush.msra.mxu0 %v493
        %738 = vmatpush.msra.mxu0 %v488
        %739 = vmatpush.msra.mxu0 %v483
        %740 = vmatpush.msra.mxu0 %v478
        %741 = vmatpush.msra.mxu0 %v473
        %742 = vmatpush.msra.mxu0 %v468
        %743 = vmatpush.msra.mxu0 %v463
        %744 = vmatpush.msra.mxu0 %v458
        %745 = vmatpush.msra.mxu0 %v453
        %746 = vmatpush.msra.mxu0 %v448
        %747 = vmatpush.msra.mxu0 %v443
        %748 = vmatmul.f32.gmra.mxu0 %v438
        %v749 = vpop.f32.mrf.mxu0
        %v750 = vadd.f32 %v605, %v749
        %751 = vdwg.mxu0
        %752 = vmatpush.msra.mxu0 %v598
        %753 = vmatpush.msra.mxu0 %v593
        %754 = vmatpush.msra.mxu0 %v588
        %755 = vmatpush.msra.mxu0 %v583
        %756 = vmatpush.msra.mxu0 %v578
        %757 = vmatpush.msra.mxu0 %v573
        %758 = vmatpush.msra.mxu0 %v568
        %759 = vmatpush.msra.mxu0 %v563
        %760 = vmatpush.msra.mxu0 %v558
        %761 = vmatpush.msra.mxu0 %v553
        %762 = vmatpush.msra.mxu0 %v548
        %763 = vmatpush.msra.mxu0 %v543
        %764 = vmatpush.msra.mxu0 %v538
        %765 = vmatpush.msra.mxu0 %v533
        %766 = vmatpush.msra.mxu0 %v528
        %767 = vmatpush.msra.mxu0 %v523
        %768 = vmatmul.f32.gmra.mxu0 %v439
        %v769 = vpop.f32.mrf.mxu0
        %v770 = vadd.f32 %v750, %v769
        %771 = vdwg.mxu0
        %772 = vmatpush.msra.mxu0 %v519
        %773 = vmatpush.msra.mxu0 %v514
        %774 = vmatpush.msra.mxu0 %v509
        %775 = vmatpush.msra.mxu0 %v504
        %776 = vmatpush.msra.mxu0 %v499
        %777 = vmatpush.msra.mxu0 %v494
        %778 = vmatpush.msra.mxu0 %v489
        %779 = vmatpush.msra.mxu0 %v484
        %780 = vmatpush.msra.mxu0 %v479
        %781 = vmatpush.msra.mxu0 %v474
        %782 = vmatpush.msra.mxu0 %v469
        %783 = vmatpush.msra.mxu0 %v464
        %784 = vmatpush.msra.mxu0 %v459
        %785 = vmatpush.msra.mxu0 %v454
        %786 = vmatpush.msra.mxu0 %v449
        %787 = vmatpush.msra.mxu0 %v444
        %788 = vmatmul.f32.gmra.mxu0 %v438
        %v789 = vpop.f32.mrf.mxu0
        %v790 = vadd.f32 %v606, %v789
        %791 = vdwg.mxu0
        %792 = vmatpush.msra.mxu0 %v599
        %793 = vmatpush.msra.mxu0 %v594
        %794 = vmatpush.msra.mxu0 %v589
        %795 = vmatpush.msra.mxu0 %v584
        %796 = vmatpush.msra.mxu0 %v579
        %797 = vmatpush.msra.mxu0 %v574
        %798 = vmatpush.msra.mxu0 %v569
        %799 = vmatpush.msra.mxu0 %v564
        %800 = vmatpush.msra.mxu0 %v559
        %801 = vmatpush.msra.mxu0 %v554
        %802 = vmatpush.msra.mxu0 %v549
        %803 = vmatpush.msra.mxu0 %v544
        %804 = vmatpush.msra.mxu0 %v539
        %805 = vmatpush.msra.mxu0 %v534
        %806 = vmatpush.msra.mxu0 %v529
        %807 = vmatpush.msra.mxu0 %v524
        %808 = vmatmul.f32.gmra.mxu0 %v439
        %v809 = vpop.f32.mrf.mxu0
        %v810 = vadd.f32 %v790, %v809
        %811 = vdwg.mxu0
        %v812 = vmax.f32 %v650, 0.0
        %v813 = vmax.f32 %v690, 0.0
        %v814 = vmax.f32 %v730, 0.0
        %v815 = vmax.f32 %v770, 0.0
        %v816 = vmax.f32 %v810, 0.0
        %v817 = vld [vmem:[%s7] sm:$0xff]
        %v818 = vld [vmem:[%s7 + $0x8] sm:$0xff]
        %v819 = vld [vmem:[%s7 + $0x10] sm:$0xff]
        %v820 = vld [vmem:[%s7 + $0x18] sm:$0xff]
        %v821 = vld [vmem:[%s7 + $0x20] sm:$0xff]
        %v822 = vld [vmem:[%s7 + $0x28] sm:$0xff]
        %v823 = vld [vmem:[%s7 + $0x30] sm:$0xff]
        %v824 = vld [vmem:[%s7 + $0x38] sm:$0xff]
        %v825 = vld [vmem:[%s7 + $0x40] sm:$0xff]
        %v826 = vld [vmem:[%s7 + $0x48] sm:$0xff]
        %v827 = vld [vmem:[%s7 + $0x50] sm:$0xff]
        %v828 = vld [vmem:[%s7 + $0x58] sm:$0xff]
        %v829 = vld [vmem:[%s7 + $0x60] sm:$0xff]
        %v830 = vld [vmem:[%s7 + $0x68] sm:$0xff]
        %v831 = vld [vmem:[%s7 + $0x70] sm:$0xff]
        %v832 = vld [vmem:[%s7 + $0x78] sm:$0xff]
        %v833 = vld [vmem:[%s7 + $0x80] sm:$0xff]
        %v834 = vld [vmem:[%s7 + $0x88] sm:$0xff]
        %v835 = vld [vmem:[%s7 + $0x90] sm:$0xff]
        %v836 = vld [vmem:[%s7 + $0x98] sm:$0xff]
        %v837 = vld [vmem:[%s7 + $0xa0] sm:$0xff]
        %v838 = vld [vmem:[%s7 + $0xa8] sm:$0xff]
        %v839 = vld [vmem:[%s7 + $0xb0] sm:$0xff]
        %v840 = vld [vmem:[%s7 + $0xb8] sm:$0xff]
        %v841 = vld [vmem:[%s7 + $0xc0] sm:$0xff]
        %v842 = vld [vmem:[%s7 + $0xc8] sm:$0xff]
        %v843 = vld [vmem:[%s7 + $0xd0] sm:$0xff]
        %v844 = vld [vmem:[%s7 + $0xd8] sm:$0xff]
        %v845 = vld [vmem:[%s7 + $0xe0] sm:$0xff]
        %v846 = vld [vmem:[%s7 + $0xe8] sm:$0xff]
        %v847 = vld [vmem:[%s7 + $0xf0] sm:$0xff]
        %v848 = vld [vmem:[%s7 + $0xf8] sm:$0xff]
        %v849 = vld [vmem:[%s7 + $0x100] sm:$0xff]
        %v850 = vld [vmem:[%s7 + $0x108] sm:$0xff]
        %v851 = vld [vmem:[%s7 + $0x110] sm:$0xff]
        %v852 = vld [vmem:[%s7 + $0x118] sm:$0xff]
        %v853 = vld [vmem:[%s7 + $0x120] sm:$0xff]
        %v854 = vld [vmem:[%s7 + $0x128] sm:$0xff]
        %v855 = vld [vmem:[%s7 + $0x130] sm:$0xff]
        %v856 = vld [vmem:[%s7 + $0x138] sm:$0xff]
        %v857 = vld [vmem:[%s7 + $0x140] sm:$0xff]
        %v858 = vld [vmem:[%s7 + $0x148] sm:$0xff]
        %v859 = vld [vmem:[%s7 + $0x150] sm:$0xff]
        %v860 = vld [vmem:[%s7 + $0x158] sm:$0xff]
        %v861 = vld [vmem:[%s7 + $0x160] sm:$0xff]
        %v862 = vld [vmem:[%s7 + $0x168] sm:$0xff]
        %v863 = vld [vmem:[%s7 + $0x170] sm:$0xff]
        %v864 = vld [vmem:[%s7 + $0x178] sm:$0xff]
        %v865 = vld [vmem:[%s7 + $0x180] sm:$0xff]
        %v866 = vld [vmem:[%s7 + $0x188] sm:$0xff]
        %v867 = vld [vmem:[%s7 + $0x190] sm:$0xff]
        %v868 = vld [vmem:[%s7 + $0x198] sm:$0xff]
        %v869 = vld [vmem:[%s7 + $0x1a0] sm:$0xff]
        %v870 = vld [vmem:[%s7 + $0x1a8] sm:$0xff]
        %v871 = vld [vmem:[%s7 + $0x1b0] sm:$0xff]
        %v872 = vld [vmem:[%s7 + $0x1b8] sm:$0xff]
        %v873 = vld [vmem:[%s7 + $0x1c0] sm:$0xff]
        %v874 = vld [vmem:[%s7 + $0x1c8] sm:$0xff]
        %v875 = vld [vmem:[%s7 + $0x1d0] sm:$0xff]
        %v876 = vld [vmem:[%s7 + $0x1d8] sm:$0xff]
        %v877 = vld [vmem:[%s7 + $0x1e0] sm:$0xff]
        %v878 = vld [vmem:[%s7 + $0x1e8] sm:$0xff]
        %v879 = vld [vmem:[%s7 + $0x1f0] sm:$0xff]
        %v880 = vld [vmem:[%s7 + $0x1f8] sm:$0xff]
        %v881 = vld [vmem:[%s7 + $0x200] sm:$0xff]
        %v882 = vld [vmem:[%s7 + $0x208] sm:$0xff]
        %v883 = vld [vmem:[%s7 + $0x210] sm:$0xff]
        %v884 = vld [vmem:[%s7 + $0x218] sm:$0xff]
        %v885 = vld [vmem:[%s7 + $0x220] sm:$0xff]
        %v886 = vld [vmem:[%s7 + $0x228] sm:$0xff]
        %v887 = vld [vmem:[%s7 + $0x230] sm:$0xff]
        %v888 = vld [vmem:[%s7 + $0x238] sm:$0xff]
        %v889 = vld [vmem:[%s7 + $0x240] sm:$0xff]
        %v890 = vld [vmem:[%s7 + $0x248] sm:$0xff]
        %v891 = vld [vmem:[%s7 + $0x250] sm:$0xff]
        %v892 = vld [vmem:[%s7 + $0x258] sm:$0xff]
        %v893 = vld [vmem:[%s7 + $0x260] sm:$0xff]
        %v894 = vld [vmem:[%s7 + $0x268] sm:$0xff]
        %v895 = vld [vmem:[%s7 + $0x270] sm:$0xff]
        %v896 = vld [vmem:[%s7 + $0x278] sm:$0xff]
        %v897 = vld [vmem:[%s7 + $0x280] sm:$0xff]
        %v898 = vld [vmem:[%s7 + $0x288] sm:$0xff]
        %v899 = vld [vmem:[%s7 + $0x290] sm:$0xff]
        %v900 = vld [vmem:[%s7 + $0x298] sm:$0xff]
        %v901 = vld [vmem:[%s7 + $0x2a0] sm:$0xff]
        %v902 = vld [vmem:[%s7 + $0x2a8] sm:$0xff]
        %v903 = vld [vmem:[%s7 + $0x2b0] sm:$0xff]
        %v904 = vld [vmem:[%s7 + $0x2b8] sm:$0xff]
        %v905 = vld [vmem:[%s7 + $0x2c0] sm:$0xff]
        %v906 = vld [vmem:[%s7 + $0x2c8] sm:$0xff]
        %v907 = vld [vmem:[%s7 + $0x2d0] sm:$0xff]
        %v908 = vld [vmem:[%s7 + $0x2d8] sm:$0xff]
        %v909 = vld [vmem:[%s7 + $0x2e0] sm:$0xff]
        %v910 = vld [vmem:[%s7 + $0x2e8] sm:$0xff]
        %v911 = vld [vmem:[%s7 + $0x2f0] sm:$0xff]
        %v912 = vld [vmem:[%s7 + $0x2f8] sm:$0xff]
        %v913 = vld [vmem:[%s7 + $0x300] sm:$0xff]
        %v914 = vld [vmem:[%s7 + $0x308] sm:$0xff]
        %v915 = vld [vmem:[%s7 + $0x310] sm:$0xff]
        %v916 = vld [vmem:[%s7 + $0x318] sm:$0xff]
        %v917 = vld [vmem:[%s7 + $0x320] sm:$0xff]
        %v918 = vld [vmem:[%s7 + $0x328] sm:$0xff]
        %v919 = vld [vmem:[%s7 + $0x330] sm:$0xff]
        %v920 = vld [vmem:[%s7 + $0x338] sm:$0xff]
        %v921 = vld [vmem:[%s7 + $0x340] sm:$0xff]
        %v922 = vld [vmem:[%s7 + $0x348] sm:$0xff]
        %v923 = vld [vmem:[%s7 + $0x350] sm:$0xff]
        %v924 = vld [vmem:[%s7 + $0x358] sm:$0xff]
        %v925 = vld [vmem:[%s7 + $0x360] sm:$0xff]
        %v926 = vld [vmem:[%s7 + $0x368] sm:$0xff]
        %v927 = vld [vmem:[%s7 + $0x370] sm:$0xff]
        %v928 = vld [vmem:[%s7 + $0x378] sm:$0xff]
        %v929 = vld [vmem:[%s7 + $0x380] sm:$0xff]
        %v930 = vld [vmem:[%s7 + $0x388] sm:$0xff]
        %v931 = vld [vmem:[%s7 + $0x390] sm:$0xff]
        %v932 = vld [vmem:[%s7 + $0x398] sm:$0xff]
        %v933 = vld [vmem:[%s7 + $0x3a0] sm:$0xff]
        %v934 = vld [vmem:[%s7 + $0x3a8] sm:$0xff]
        %v935 = vld [vmem:[%s7 + $0x3b0] sm:$0xff]
        %v936 = vld [vmem:[%s7 + $0x3b8] sm:$0xff]
        %v937 = vld [vmem:[%s7 + $0x3c0] sm:$0xff]
        %v938 = vld [vmem:[%s7 + $0x3c8] sm:$0xff]
        %v939 = vld [vmem:[%s7 + $0x3d0] sm:$0xff]
        %v940 = vld [vmem:[%s7 + $0x3d8] sm:$0xff]
        %v941 = vld [vmem:[%s7 + $0x3e0] sm:$0xff]
        %v942 = vld [vmem:[%s7 + $0x3e8] sm:$0xff]
        %v943 = vld [vmem:[%s7 + $0x3f0] sm:$0xff]
        %v944 = vld [vmem:[%s7 + $0x3f8] sm:$0xff]
        %v945 = vld [vmem:[%s7 + $0x400] sm:$0xff]
        %v946 = vld [vmem:[%s7 + $0x408] sm:$0xff]
        %v947 = vld [vmem:[%s7 + $0x410] sm:$0xff]
        %v948 = vld [vmem:[%s7 + $0x418] sm:$0xff]
        %v949 = vld [vmem:[%s7 + $0x420] sm:$0xff]
        %v950 = vld [vmem:[%s7 + $0x428] sm:$0xff]
        %v951 = vld [vmem:[%s7 + $0x430] sm:$0xff]
        %v952 = vld [vmem:[%s7 + $0x438] sm:$0xff]
        %v953 = vld [vmem:[%s8] sm:$0x3]
        %v955 = vperm.slane %v953, 0
        %v956 = vperm.slane %v953, 1
        %vm959 = vcmask 261120
        %v961 = vsel %vm959, %v816, 0
        %963 = vmatpush.msra.mxu0 %v847
        %964 = vmatpush.msra.mxu0 %v845
        %965 = vmatpush.msra.mxu0 %v843
        %966 = vmatpush.msra.mxu0 %v841
        %967 = vmatpush.msra.mxu0 %v839
        %968 = vmatpush.msra.mxu0 %v837
        %969 = vmatpush.msra.mxu0 %v835
        %970 = vmatpush.msra.mxu0 %v833
        %971 = vmatpush.msra.mxu0 %v831
        %972 = vmatpush.msra.mxu0 %v829
        %973 = vmatpush.msra.mxu0 %v827
        %974 = vmatpush.msra.mxu0 %v825
        %975 = vmatpush.msra.mxu0 %v823
        %976 = vmatpush.msra.mxu0 %v821
        %977 = vmatpush.msra.mxu0 %v819
        %978 = vmatpush.msra.mxu0 %v817
        %979 = vmatmul.f32.gmra.mxu0 %v812
        %v980 = vpop.f32.mrf.mxu0
        %v981 = vadd.f32 %v955, %v980
        %982 = vdwg.mxu0
        %983 = vmatpush.msra.mxu0 %v879
        %984 = vmatpush.msra.mxu0 %v877
        %985 = vmatpush.msra.mxu0 %v875
        %986 = vmatpush.msra.mxu0 %v873
        %987 = vmatpush.msra.mxu0 %v871
        %988 = vmatpush.msra.mxu0 %v869
        %989 = vmatpush.msra.mxu0 %v867
        %990 = vmatpush.msra.mxu0 %v865
        %991 = vmatpush.msra.mxu0 %v863
        %992 = vmatpush.msra.mxu0 %v861
        %993 = vmatpush.msra.mxu0 %v859
        %994 = vmatpush.msra.mxu0 %v857
        %995 = vmatpush.msra.mxu0 %v855
        %996 = vmatpush.msra.mxu0 %v853
        %997 = vmatpush.msra.mxu0 %v851
        %998 = vmatpush.msra.mxu0 %v849
        %999 = vmatmul.f32.gmra.mxu0 %v813
        %v1000 = vpop.f32.mrf.mxu0
        %v1001 = vadd.f32 %v981, %v1000
        %1002 = vdwg.mxu0
        %1003 = vmatpush.msra.mxu0 %v911
        %1004 = vmatpush.msra.mxu0 %v909
        %1005 = vmatpush.msra.mxu0 %v907
        %1006 = vmatpush.msra.mxu0 %v905
        %1007 = vmatpush.msra.mxu0 %v903
        %1008 = vmatpush.msra.mxu0 %v901
        %1009 = vmatpush.msra.mxu0 %v899
        %1010 = vmatpush.msra.mxu0 %v897
        %1011 = vmatpush.msra.mxu0 %v895
        %1012 = vmatpush.msra.mxu0 %v893
        %1013 = vmatpush.msra.mxu0 %v891
        %1014 = vmatpush.msra.mxu0 %v889
        %1015 = vmatpush.msra.mxu0 %v887
        %1016 = vmatpush.msra.mxu0 %v885
        %1017 = vmatpush.msra.mxu0 %v883
        %1018 = vmatpush.msra.mxu0 %v881
        %1019 = vmatmul.f32.gmra.mxu0 %v814
        %v1020 = vpop.f32.mrf.mxu0
        %v1021 = vadd.f32 %v1001, %v1020
        %1022 = vdwg.mxu0
        %1023 = vmatpush.msra.mxu0 %v943
        %1024 = vmatpush.msra.mxu0 %v941
        %1025 = vmatpush.msra.mxu0 %v939
        %1026 = vmatpush.msra.mxu0 %v937
        %1027 = vmatpush.msra.mxu0 %v935
        %1028 = vmatpush.msra.mxu0 %v933
        %1029 = vmatpush.msra.mxu0 %v931
        %1030 = vmatpush.msra.mxu0 %v929
        %1031 = vmatpush.msra.mxu0 %v927
        %1032 = vmatpush.msra.mxu0 %v925
        %1033 = vmatpush.msra.mxu0 %v923
        %1034 = vmatpush.msra.mxu0 %v921
        %1035 = vmatpush.msra.mxu0 %v919
        %1036 = vmatpush.msra.mxu0 %v917
        %1037 = vmatpush.msra.mxu0 %v915
        %1038 = vmatpush.msra.mxu0 %v913
        %1039 = vmatmul.f32.gmra.mxu0 %v815
        %v1040 = vpop.f32.mrf.mxu0
        %v1041 = vadd.f32 %v1021, %v1040
        %1042 = vdwg.mxu0
        %1043 = vmatpush.msra.mxu0 0.0
        %1044 = vmatpush.msra.mxu0 0.0
        %1045 = vmatpush.msra.mxu0 0.0
        %1046 = vmatpush.msra.mxu0 0.0
        %1047 = vmatpush.msra.mxu0 0.0
        %1048 = vmatpush.msra.mxu0 0.0
        %1049 = vmatpush.msra.mxu0 0.0
        %1050 = vmatpush.msra.mxu0 0.0
        %1051 = vmatpush.msra.mxu0 0.0
        %1052 = vmatpush.msra.mxu0 0.0
        %1053 = vmatpush.msra.mxu0 0.0
        %1054 = vmatpush.msra.mxu0 0.0
        %1055 = vmatpush.msra.mxu0 %v951
        %1056 = vmatpush.msra.mxu0 %v949
        %1057 = vmatpush.msra.mxu0 %v947
        %1058 = vmatpush.msra.mxu0 %v945
        %1059 = vmatmul.f32.gmra.mxu0 %v961
        %v1060 = vpop.f32.mrf.mxu0
        %v1061 = vadd.f32 %v1041, %v1060
        %1062 = vdwg.mxu0
        %1063 = vmatpush.msra.mxu0 %v848
        %1064 = vmatpush.msra.mxu0 %v846
        %1065 = vmatpush.msra.mxu0 %v844
        %1066 = vmatpush.msra.mxu0 %v842
        %1067 = vmatpush.msra.mxu0 %v840
        %1068 = vmatpush.msra.mxu0 %v838
        %1069 = vmatpush.msra.mxu0 %v836
        %1070 = vmatpush.msra.mxu0 %v834
        %1071 = vmatpush.msra.mxu0 %v832
        %1072 = vmatpush.msra.mxu0 %v830
        %1073 = vmatpush.msra.mxu0 %v828
        %1074 = vmatpush.msra.mxu0 %v826
        %1075 = vmatpush.msra.mxu0 %v824
        %1076 = vmatpush.msra.mxu0 %v822
        %1077 = vmatpush.msra.mxu0 %v820
        %1078 = vmatpush.msra.mxu0 %v818
        %1079 = vmatmul.f32.gmra.mxu0 %v812
        %v1080 = vpop.f32.mrf.mxu0
        %v1081 = vadd.f32 %v956, %v1080
        %1082 = vdwg.mxu0
        %1083 = vmatpush.msra.mxu0 %v880
        %1084 = vmatpush.msra.mxu0 %v878
        %1085 = vmatpush.msra.mxu0 %v876
        %1086 = vmatpush.msra.mxu0 %v874
        %1087 = vmatpush.msra.mxu0 %v872
        %1088 = vmatpush.msra.mxu0 %v870
        %1089 = vmatpush.msra.mxu0 %v868
        %1090 = vmatpush.msra.mxu0 %v866
        %1091 = vmatpush.msra.mxu0 %v864
        %1092 = vmatpush.msra.mxu0 %v862
        %1093 = vmatpush.msra.mxu0 %v860
        %1094 = vmatpush.msra.mxu0 %v858
        %1095 = vmatpush.msra.mxu0 %v856
        %1096 = vmatpush.msra.mxu0 %v854
        %1097 = vmatpush.msra.mxu0 %v852
        %1098 = vmatpush.msra.mxu0 %v850
        %1099 = vmatmul.f32.gmra.mxu0 %v813
        %v1100 = vpop.f32.mrf.mxu0
        %v1101 = vadd.f32 %v1081, %v1100
        %1102 = vdwg.mxu0
        %1103 = vmatpush.msra.mxu0 %v912
        %1104 = vmatpush.msra.mxu0 %v910
        %1105 = vmatpush.msra.mxu0 %v908
        %1106 = vmatpush.msra.mxu0 %v906
        %1107 = vmatpush.msra.mxu0 %v904
        %1108 = vmatpush.msra.mxu0 %v902
        %1109 = vmatpush.msra.mxu0 %v900
        %1110 = vmatpush.msra.mxu0 %v898
        %1111 = vmatpush.msra.mxu0 %v896
        %1112 = vmatpush.msra.mxu0 %v894
        %1113 = vmatpush.msra.mxu0 %v892
        %1114 = vmatpush.msra.mxu0 %v890
        %1115 = vmatpush.msra.mxu0 %v888
        %1116 = vmatpush.msra.mxu0 %v886
        %1117 = vmatpush.msra.mxu0 %v884
        %1118 = vmatpush.msra.mxu0 %v882
        %1119 = vmatmul.f32.gmra.mxu0 %v814
        %v1120 = vpop.f32.mrf.mxu0
        %v1121 = vadd.f32 %v1101, %v1120
        %1122 = vdwg.mxu0
        %1123 = vmatpush.msra.mxu0 %v944
        %1124 = vmatpush.msra.mxu0 %v942
        %1125 = vmatpush.msra.mxu0 %v940
        %1126 = vmatpush.msra.mxu0 %v938
        %1127 = vmatpush.msra.mxu0 %v936
        %1128 = vmatpush.msra.mxu0 %v934
        %1129 = vmatpush.msra.mxu0 %v932
        %1130 = vmatpush.msra.mxu0 %v930
        %1131 = vmatpush.msra.mxu0 %v928
        %1132 = vmatpush.msra.mxu0 %v926
        %1133 = vmatpush.msra.mxu0 %v924
        %1134 = vmatpush.msra.mxu0 %v922
        %1135 = vmatpush.msra.mxu0 %v920
        %1136 = vmatpush.msra.mxu0 %v918
        %1137 = vmatpush.msra.mxu0 %v916
        %1138 = vmatpush.msra.mxu0 %v914
        %1139 = vmatmul.f32.gmra.mxu0 %v815
        %v1140 = vpop.f32.mrf.mxu0
        %v1141 = vadd.f32 %v1121, %v1140
        %1142 = vdwg.mxu0
        %1143 = vmatpush.msra.mxu0 0.0
        %1144 = vmatpush.msra.mxu0 0.0
        %1145 = vmatpush.msra.mxu0 0.0
        %1146 = vmatpush.msra.mxu0 0.0
        %1147 = vmatpush.msra.mxu0 0.0
        %1148 = vmatpush.msra.mxu0 0.0
        %1149 = vmatpush.msra.mxu0 0.0
        %1150 = vmatpush.msra.mxu0 0.0
        %1151 = vmatpush.msra.mxu0 0.0
        %1152 = vmatpush.msra.mxu0 0.0
        %1153 = vmatpush.msra.mxu0 0.0
        %1154 = vmatpush.msra.mxu0 0.0
        %1155 = vmatpush.msra.mxu0 %v952
        %1156 = vmatpush.msra.mxu0 %v950
        %1157 = vmatpush.msra.mxu0 %v948
        %1158 = vmatpush.msra.mxu0 %v946
        %1159 = vmatmul.f32.gmra.mxu0 %v961
        %v1160 = vpop.f32.mrf.mxu0
        %v1161 = vadd.f32 %v1141, %v1160
        %1162 = vdwg.mxu0
        %1163 = vst [vmem:[%s323] sm:$0xff] %v1061
        %vm1164 = vcmask 64512
        %1165 = vst.msk [vmem:[%s323 + $0x8] sm:$0xff] %vm1164, %v1161
        %s1166 = sand.u32 %s225, 1
        %s1167 = scalar_lea.sflag [#allocation3], %s1166
        %s1168 = sand.u32 %s225, 1
        %s1169 = smul.addr %s1168, 16
        %s1170 = scalar_lea.vmem [#allocation2], %s1169
        // Predicated region
        $region57: #{tpu_custom_call.1} parent=55 // pred_check
          %p1171 = pneg %p235
        $region58: #{tpu_custom_call.1} parent=55 // pred_check_branch
          %1173 = sbr.rel (%p1171) target = $region60
        $region59: #{tpu_custom_call.1} parent=55 // pred_region
          %1175 = vsyncadd %s1167, 0
          %s1176 = smul.addr %s23, 2
          %s1177 = smul.addr %s1176, 8
          %s1178 = scalar_lea.hbm %s9, %s1177
          %s1180 = sshll.u32 %s1170, 4
          %s1181 = int_to_ptr.vmem [resolvable:$true] %s1180
          %s1182 = sshll.u32 %s1178, 4
          %s1183 = int_to_ptr.hbm [resolvable:$true] %s1182
          %1185 = dma.vmem_to_hbm [thread:$0]  %s1181, 256, %s1183, %s1167
        $region60: #{tpu_custom_call.1} parent=55 // pred_fallthru
          _
      $region56: #{tpu_custom_call.1} parent=5 // pred_fallthru
        _
      %p1186 = scmp.le.s32.totalorder 2, %s18
      // Predicated region
      $region61: #{tpu_custom_call.1} parent=5 // pred_check
        %p1187 = pneg %p1186
      $region62: #{tpu_custom_call.1} parent=5 // pred_check_branch
        %1189 = sbr.rel (%p1187) target = $region64
      $region63: #{tpu_custom_call.1} parent=5 // pred_region
        %s1190 = ssub.s32 %s18, 2
        // Predicated region
        $region65: #{tpu_custom_call.1} parent=63 // pred_check
          %p1191 = pneg %p241
        $region66: #{tpu_custom_call.1} parent=63 // pred_check_branch
          %1193 = sbr.rel (%p1191) target = $region68
        $region67: #{tpu_custom_call.1} parent=63 // pred_region
          %s1194 = sand.u32 %s226, 1
          %s1195 = scalar_lea.sflag [#allocation3], %s1194
          %s1196 = sand.u32 %s226, 1
          %s1197 = smul.addr %s1196, 16
          %s1198 = scalar_lea.vmem [#allocation2], %s1197
          %1200 = dma.done %s1195, 256
        $region68: #{tpu_custom_call.1} parent=63 // pred_fallthru
          _
      $region64: #{tpu_custom_call.1} parent=5 // pred_fallthru
        _
    $region6: #{tpu_custom_call.1} parent=1 // loop_footer
      %s22 = sadd.s32 1, %s18
    $region7: #{tpu_custom_call.1} parent=1 // loop_footer_branch
      %17 = sbr.rel target = $region3
    $region8: #{tpu_custom_call.1} parent=1 // loop_exit
      _
    %1201 = vsyncpa [#allocation3], 1
    %s1202 = scalar_lea.sflag [#allocation3], 1
    %1203 = vsyncpa %s1202, 1

</llo_original>
